<compile_context>
chip_gen: v7x
topology: tpu7x:2x2x1
jax: 0.10.0
libtpu: 0.0.40
codegen_flags: <defaults>
</compile_context>

<pallas_src>
import numpy as np

import jax
import jax.numpy as jnp
from jax.experimental import pallas as pl
from jax.experimental.pallas import tpu as pltpu


def _round_up(a, m):
    return (a + m - 1) // m * m


def _cdiv(a, b):
    return -(-a // b)


def _make_tv_kernel(H, W, n_lanes, cp, num_chunks):
    """Build the per-block TV partial-sum kernel with static params baked in."""

    def kernel(x_ref, m_ref, o_ref):
        # Loop-invariant per-lane validity masks (0.0 / 1.0), loaded once.
        mask_h = m_ref[0:1, :]   # vertical (row-direction) diff is valid at lane j
        mask_w = m_ref[1:2, :]   # horizontal (column-direction) diff is valid at lane j

        def accum(xv, h_s, w_s):
            xv = xv.astype(jnp.float32)            # f32 math even for bf16 inputs
            if H > 1:
                dh = xv[:, W:] - xv[:, : n_lanes - W]
                h_s = h_s + jnp.sum(dh * dh * mask_h[:, : n_lanes - W])
            if W > 1:
                dw = xv[:, 1:] - xv[:, : n_lanes - 1]
                w_s = w_s + jnp.sum(dw * dw * mask_w[:, : n_lanes - 1])
            return h_s, w_s

        zero = jnp.zeros((), jnp.float32)
        if num_chunks == 1:
            h_s, w_s = accum(x_ref[...], zero, zero)
        else:
            def body(c, carry):
                start = c * cp
                if cp % 8 == 0:
                    start = pl.multiple_of(start, 8)
                xv = x_ref[pl.ds(start, cp), :]
                return accum(xv, *carry)

            h_s, w_s = jax.lax.fori_loop(0, num_chunks, body, (zero, zero))

        # Lane-dense (1, 2, 128) output tile: row 0 = vertical sum, row 1 = horizontal.
        row = jax.lax.broadcasted_iota(jnp.int32, (1, 2, 128), 1)
        o_ref[...] = jnp.where(row == 0, h_s, w_s)

    return kernel


@jax.jit
def i_tv(x):
    """Total-variation loss, semantics identical to the PyTorch I_TV module.

    x: (B, C, H, W) float array.  Returns a float32 scalar:
        (sum((x[:,:,1:,:]-x[:,:,:-1,:])**2) / ((H-1)*W)
       + sum((x[:,:,:,1:]-x[:,:,:,:-1])**2) / (H*(W-1))) / B
    (H == 1 or W == 1 yields 0/0 = NaN, matching the PyTorch reference.)
    """
    B, C, H, W = x.shape
    count_h = (H - 1) * W
    count_w = H * (W - 1)

    n_planes = B * C
    HW = H * W
    N = _round_up(HW, 128)                      # lane-dense flattened plane width

    # One plane per row, flattened H*W on the lane axis (zero-padded to N).
    xr = x.reshape(n_planes, HW)
    if N != HW:
        xr = jnp.pad(xr, ((0, 0), (0, N - HW)))

    # Per-lane validity masks (trace-time constants).
    j = np.arange(N)
    mask_h = (j < (H - 1) * W).astype(np.float32)
    mask_w = (((j % W) != (W - 1)) & (j < HW)).astype(np.float32)
    masks = jnp.asarray(np.stack([mask_h, mask_w], axis=0))       # (2, N)

    # Generation-aware VMEM budgeting (v5e/v6e: 128 MiB physical, v7x: 64 MiB).
    try:
        vmem_cap = int(getattr(pltpu.get_tpu_info(), "vmem_capacity_bytes",
                               64 * 1024 * 1024))
    except Exception:
        vmem_cap = 64 * 1024 * 1024
    if vmem_cap <= 0:
        vmem_cap = 64 * 1024 * 1024
    vmem_limit = int(min(vmem_cap * 7 // 10, 100 * 1024 * 1024))
    target_block_bytes = max(2 * 1024 * 1024, vmem_cap // 10)     # input-dtype DMA block
    chunk_f32_budget = 1 * 1024 * 1024                            # per-chunk f32 temporaries

    itemsize = x.dtype.itemsize
    plane_bytes = N * itemsize                                    # lane-dense, input dtype

    t = max(1, target_block_bytes // plane_bytes)                 # planes per grid block
    t = min(t, n_planes)
    if n_planes >= 16:
        # Keep >= 2 grid steps so the "parallel" axis can shard across v7x's 2 TCs.
        t = min(t, _cdiv(n_planes, 2))

    if n_planes <= 8:
        t = n_planes                                              # block dim == full dim
        cp = t
    else:
        t = max(8, (t // 8) * 8)                                  # sublane-aligned block
        cp = (chunk_f32_budget // (N * 4)) // 8 * 8               # planes per compute chunk
        cp = max(8, min(t, cp))
        t = max(cp, (t // cp) * cp)                               # whole number of chunks
    num_chunks = t // cp

    nb = _cdiv(n_planes, t)
    pad = nb * t - n_planes
    if pad:
        # Zero planes contribute exactly zero to both difference sums.
        xr = jnp.pad(xr, ((0, pad), (0, 0)))

    kernel = _make_tv_kernel(H, W, N, cp, num_chunks)

    partials = pl.pallas_call(
        kernel,
        out_shape=jax.ShapeDtypeStruct((nb, 2, 128), jnp.float32),
        grid_spec=pltpu.PrefetchScalarGridSpec(
            num_scalar_prefetch=0,
            grid=(nb,),
            in_specs=[
                pl.BlockSpec((t, N), lambda i: (i, 0)),
                pl.BlockSpec((2, N), lambda i: (0, 0)),
            ],
            out_specs=pl.BlockSpec((1, 2, 128), lambda i: (i, 0, 0)),
        ),
        compiler_params=pltpu.CompilerParams(
            dimension_semantics=("parallel",),
            vmem_limit_bytes=vmem_limit,
        ),
    )(xr, masks)

    # Every lane of row 0 / row 1 holds the block's vertical / horizontal sum.
    h_tv = jnp.sum(partials[:, 0, 0])
    w_tv = jnp.sum(partials[:, 1, 0])
    return (h_tv / count_h + w_tv / count_w) / B


def i_tv_ref(x):
    B, _, H, W = x.shape
    count_h = (H - 1) * W
    count_w = H * (W - 1)
    h_tv = jnp.sum((x[:, :, 1:, :] - x[:, :, : H - 1, :]) ** 2)
    w_tv = jnp.sum((x[:, :, :, 1:] - x[:, :, :, : W - 1]) ** 2)
    return (h_tv / count_h + w_tv / count_w) / B


if __name__ == "__main__":
    key = jax.random.PRNGKey(0)
    x = jax.random.normal(key, (2, 4, 16, 16), dtype=jnp.float32)

    out = jax.block_until_ready(i_tv(x))
    ref = jax.block_until_ready(i_tv_ref(x))

    assert jnp.allclose(out, ref, rtol=1e-5, atol=1e-5), (out, ref)
    print("KERNEL_OK")
</pallas_src>

<mosaic_0001>
module attributes {stable_mosaic.version = 11 : i64} {
  func.func @kernel(%arg0: i32, %arg1: memref<8x256xf32, #tpu.memory_space<vmem>>, %arg2: memref<2x256xf32, #tpu.memory_space<vmem>>, %arg3: memref<1x2x128xf32, #tpu.memory_space<vmem>>) attributes {dimension_semantics = [#tpu.dimension_semantics<parallel>], iteration_bounds = array<i64: 1>, scalar_prefetch = 0 : i64, scratch_operands = 0 : i64, tpu.core_type = #tpu.core_type<tc>, window_params = [{transform_indices = @transform_0, window_bounds = array<i64: 8, 256>}, {pipeline_mode = #tpu.pipeline_mode<synchronous>, transform_indices = @transform_1, window_bounds = array<i64: 2, 256>}, {transform_indices = @transform_2, window_bounds = array<i64: 1, 2, 128>}]} {
    %c0 = arith.constant 0 : index
    %c0_0 = arith.constant 0 : index
    %0 = vector.load %arg2[%c0, %c0_0] : memref<2x256xf32, #tpu.memory_space<vmem>>, vector<1x256xf32>
    %c1 = arith.constant 1 : index
    %c0_1 = arith.constant 0 : index
    %1 = vector.load %arg2[%c1, %c0_1] : memref<2x256xf32, #tpu.memory_space<vmem>>, vector<1x256xf32>
    %c0_2 = arith.constant 0 : index
    %c0_3 = arith.constant 0 : index
    %2 = vector.load %arg1[%c0_2, %c0_3] : memref<8x256xf32, #tpu.memory_space<vmem>>, vector<8x256xf32>
    %3 = vector.extract_strided_slice %2 {offsets = [0, 16], sizes = [8, 240], strides = [1, 1]} : vector<8x256xf32> to vector<8x240xf32>
    %4 = vector.extract_strided_slice %2 {offsets = [0, 0], sizes = [8, 240], strides = [1, 1]} : vector<8x256xf32> to vector<8x240xf32>
    %5 = arith.subf %3, %4 : vector<8x240xf32>
    %6 = arith.mulf %5, %5 : vector<8x240xf32>
    %7 = vector.extract_strided_slice %0 {offsets = [0, 0], sizes = [1, 240], strides = [1, 1]} : vector<1x256xf32> to vector<1x240xf32>
    %8 = vector.broadcast %7 : vector<1x240xf32> to vector<8x240xf32>
    %9 = arith.mulf %6, %8 : vector<8x240xf32>
    %10 = vector.shape_cast %9 : vector<8x240xf32> to vector<1x8x240xf32>
    %cst = arith.constant dense<0.000000e+00> : vector<1xf32>
    %11 = vector.multi_reduction <add>, %10, %cst [1, 2] : vector<1x8x240xf32> to vector<1xf32>
    %12 = vector.shape_cast %11 : vector<1xf32> to vector<1x1x1xf32>
    %13 = vector.extract %12[0, 0, 0] : f32 from vector<1x1x1xf32>
    %cst_4 = arith.constant 0.000000e+00 : f32
    %14 = arith.addf %cst_4, %13 : f32
    %15 = vector.extract_strided_slice %2 {offsets = [0, 1], sizes = [8, 255], strides = [1, 1]} : vector<8x256xf32> to vector<8x255xf32>
    %16 = vector.extract_strided_slice %2 {offsets = [0, 0], sizes = [8, 255], strides = [1, 1]} : vector<8x256xf32> to vector<8x255xf32>
    %17 = arith.subf %15, %16 : vector<8x255xf32>
    %18 = arith.mulf %17, %17 : vector<8x255xf32>
    %19 = vector.extract_strided_slice %1 {offsets = [0, 0], sizes = [1, 255], strides = [1, 1]} : vector<1x256xf32> to vector<1x255xf32>
    %20 = vector.broadcast %19 : vector<1x255xf32> to vector<8x255xf32>
    %21 = arith.mulf %18, %20 : vector<8x255xf32>
    %22 = vector.shape_cast %21 : vector<8x255xf32> to vector<1x8x255xf32>
    %cst_5 = arith.constant dense<0.000000e+00> : vector<1xf32>
    %23 = vector.multi_reduction <add>, %22, %cst_5 [1, 2] : vector<1x8x255xf32> to vector<1xf32>
    %24 = vector.shape_cast %23 : vector<1xf32> to vector<1x1x1xf32>
    %25 = vector.extract %24[0, 0, 0] : f32 from vector<1x1x1xf32>
    %cst_6 = arith.constant 0.000000e+00 : f32
    %26 = arith.addf %cst_6, %25 : f32
    %27 = tpu.iota {dimensions = array<i32: 1>} : vector<1x2x128xi32>
    %c0_i32 = arith.constant 0 : i32
    %28 = vector.broadcast %c0_i32 : i32 to vector<1x2x128xi32>
    %29 = arith.cmpi eq, %27, %28 : vector<1x2x128xi32>
    %30 = vector.broadcast %14 : f32 to vector<1x2x128xf32>
    %31 = vector.broadcast %26 : f32 to vector<1x2x128xf32>
    %32 = arith.select %29, %30, %31 : vector<1x2x128xi1>, vector<1x2x128xf32>
    %c0_7 = arith.constant 0 : index
    %c0_8 = arith.constant 0 : index
    %c0_9 = arith.constant 0 : index
    %33 = vector.load %arg3[%c0_7, %c0_8, %c0_9] : memref<1x2x128xf32, #tpu.memory_space<vmem>>, vector<1x2x128xf32>
    tpu.vector_store %arg3[%c0_7, %c0_8, %c0_9], %32 {strides = array<i32>} : memref<1x2x128xf32, #tpu.memory_space<vmem>>, vector<1x2x128xf32>,
    return
  }
  func.func @transform_0(%arg0: i32) -> (i32, i32) {
    %c0_i32 = arith.constant 0 : i32
    %c0_i32_0 = arith.constant 0 : i32
    return %arg0, %c0_i32 : i32, i32
  }
  func.func @transform_1(%arg0: i32) -> (i32, i32) {
    %c0_i32 = arith.constant 0 : i32
    %c0_i32_0 = arith.constant 0 : i32
    %c0_i32_1 = arith.constant 0 : i32
    return %c0_i32, %c0_i32_0 : i32, i32
  }
  func.func @transform_2(%arg0: i32) -> (i32, i32, i32) {
    %c0_i32 = arith.constant 0 : i32
    %c0_i32_0 = arith.constant 0 : i32
    %c0_i32_1 = arith.constant 0 : i32
    return %arg0, %c0_i32, %c0_i32_0 : i32, i32, i32
  }
}

</mosaic_0001>

<llo_original>
// kernel: i_tv.1
$region0: #{i_tv.1}
  #allocation0 [shape = 'u32[]', space=smem, size = 0x4, offset = 0x4, fixed_abs, tag = 'smem constant byte address 0x4 - core index']
  #allocation1 [shape = 'u32[144,128]{1,0:T(1,128)}', space=vmem, size = 0x12000, scoped, tag = 'internal scratch']
  %s0 = inlined_call_operand.vmem [shape: f32[8,256], index: 0, kind: input, shape index: {}]
  %s1 = inlined_call_operand.vmem [shape: f32[2,256], index: 1, kind: input, shape index: {}]
  %s2 = inlined_call_operand.vmem [shape: f32[1,2,128], index: 2, kind: output, shape index: {}]
  %s3 = sld [smem:[#allocation0]]
  $region18: #{i_tv.1} parent=0
    _
  %s5 = ssub.s32 1, %s3
  %s6 = scalar_select 0, %s5, %s3
  // Predicated region
  $region2: #{i_tv.1} parent=0 // pred_check
    _
  $region3: #{i_tv.1} parent=0 // pred_check_branch
    %8 = sbr.rel (0) target = $region5
  $region4: #{i_tv.1} parent=0 // pred_region
    _
  $region5: #{i_tv.1} parent=0 // pred_fallthru
    _
  // Predicated region
  $region6: #{i_tv.1} parent=0 // pred_check
    _
  $region7: #{i_tv.1} parent=0 // pred_check_branch
    %10 = sbr.rel (0) target = $region9
  $region8: #{i_tv.1} parent=0 // pred_region
    _
  $region9: #{i_tv.1} parent=0 // pred_fallthru
    _
  %v11 = vld [vmem:[%s1] ss:$2 sm:$0x3]
  %s12 = scalar_lea.vmem %s1, 1
  %v13 = vld [vmem:[%s12] ss:$2 sm:$0x3]
  %v14 = vld [vmem:[%s0] sm:$0xff]
  %v15 = vld [vmem:[%s0 + $0x8] sm:$0xff]
  %18 = vrot.lane.b32.xlu0 %v14, 16
  %v19 = vpop.permute.xlu0 %18
  %20 = vrot.lane.b32.xlu0 %v15, 16
  %v21 = vpop.permute.xlu0 %20
  %vm22 = vcmask 130048
  %v23 = vsel %vm22, %v19, %v21
  %v26 = vsub.f32 %v14, %v19
  %v27 = vsub.f32 %v15, %v23
  %v28 = vmul.f32 %v26, %v26
  %v29 = vmul.f32 %v27, %v27
  %v31 = vlaneseq
  %v32 = vshrl.u32 %v31, 7
  %v33 = vsub.s32 0, %v32
  %v34 = vrot.slane %v11, %v33
  %v35 = vlaneseq
  %v36 = vshrl.u32 %v35, 7
  %v37 = vsub.s32 1, %v36
  %v38 = vrot.slane %v11, %v37
  %39 = vrot.lane.b32.xlu0 %v34, 16
  %v40 = vpop.permute.xlu0 %39
  %41 = vrot.lane.b32.xlu0 %v38, 16
  %v42 = vpop.permute.xlu0 %41
  %v43 = vsel %vm22, %v40, %v42
  %v46 = vmul.f32 %v28, %v40
  %v47 = vmul.f32 %v29, %v43
  %50 = vrot.lane.b32.xlu0 %v46, 112
  %v51 = vpop.permute.xlu0 %50
  %52 = vrot.lane.b32.xlu0 %v47, 112
  %v53 = vpop.permute.xlu0 %52
  %vm54 = vcmask 916480
  %v55 = vsel %vm54, %v51, %v53
  %v58 = vsel %vm54, %v53, 0.0
  %v59 = vadd.f32 %v55, %v58
  %60 = vadd.xlane.f32.xlu0 %v59
  %v61 = vpop.xlane.xlu0 %60
  %v62 = vrot.slane %v61, 4
  %v63 = vadd.f32 %v61, %v62
  %v64 = vrot.slane %v63, 2
  %v65 = vadd.f32 %v63, %v64
  %v66 = vrot.slane %v65, 1
  %v67 = vadd.f32 %v65, %v66
  %s68 = vtos %v67
  %s69 = sadd.f32 %s68, 0.0
  %70 = vrot.lane.b32.xlu0 %v14, 1
  %v71 = vpop.permute.xlu0 %70
  %72 = vrot.lane.b32.xlu0 %v15, 1
  %v73 = vpop.permute.xlu0 %72
  %vm74 = vcmask 7168
  %v75 = vsel %vm74, %v71, %v73
  %v78 = vsub.f32 %v14, %v71
  %v79 = vsub.f32 %v15, %v75
  %v80 = vmul.f32 %v78, %v78
  %v81 = vmul.f32 %v79, %v79
  %v83 = vlaneseq
  %v84 = vshrl.u32 %v83, 7
  %v85 = vsub.s32 0, %v84
  %v86 = vrot.slane %v13, %v85
  %v87 = vlaneseq
  %v88 = vshrl.u32 %v87, 7
  %v89 = vsub.s32 1, %v88
  %v90 = vrot.slane %v13, %v89
  %91 = vrot.lane.b32.xlu0 %v86, 1
  %v92 = vpop.permute.xlu0 %91
  %93 = vrot.lane.b32.xlu0 %v90, 1
  %v94 = vpop.permute.xlu0 %93
  %v95 = vsel %vm74, %v92, %v94
  %v98 = vmul.f32 %v80, %v92
  %v99 = vmul.f32 %v81, %v95
  %102 = vrot.lane.b32.xlu0 %v98, 127
  %v103 = vpop.permute.xlu0 %102
  %104 = vrot.lane.b32.xlu0 %v99, 127
  %v105 = vpop.permute.xlu0 %104
  %vm106 = vcmask 1039360
  %v107 = vsel %vm106, %v103, %v105
  %v110 = vsel %vm106, %v105, 0.0
  %v111 = vadd.f32 %v107, %v110
  %112 = vadd.xlane.f32.xlu0 %v111
  %v113 = vpop.xlane.xlu0 %112
  %v114 = vrot.slane %v113, 4
  %v115 = vadd.f32 %v113, %v114
  %v116 = vrot.slane %v115, 2
  %v117 = vadd.f32 %v115, %v116
  %v118 = vrot.slane %v117, 1
  %v119 = vadd.f32 %v117, %v118
  %s120 = vtos %v119
  %s121 = sadd.f32 %s120, 0.0
  %v122 = vlaneseq
  %v123 = vshrl.u32 %v122, 7
  %vm124 = vcmp.eq.s32.totalorder %v123, 0
  %v125 = vstv %s69
  %v126 = vstv %s121
  %v127 = vsel %vm124, %v125, %v126
  %128 = vst [vmem:[%s2] sm:$0x3] %v127
  // Predicated region
  $region10: #{i_tv.1} parent=0 // pred_check
    _
  $region11: #{i_tv.1} parent=0 // pred_check_branch
    %130 = sbr.rel (0) target = $region13
  $region12: #{i_tv.1} parent=0 // pred_region
    _
  $region13: #{i_tv.1} parent=0 // pred_fallthru
    _
  // Predicated region
  $region14: #{i_tv.1} parent=0 // pred_check
    _
  $region15: #{i_tv.1} parent=0 // pred_check_branch
    %132 = sbr.rel (0) target = $region17
  $region16: #{i_tv.1} parent=0 // pred_region
    _
  $region17: #{i_tv.1} parent=0 // pred_fallthru
    _

</llo_original>
